<compile_context>
chip_gen: v7x
topology: tpu7x:2x2x1
jax: 0.10.0
libtpu: 0.0.40
codegen_flags: <defaults>
</compile_context>

<pallas_src>
import jax
import jax.numpy as jnp
from jax.experimental import pallas as pl
from jax.experimental.pallas import tpu as pltpu


_LANE = 128        # lane quantum (last dim of any tile)
_SUBLANE = 16      # sublane quantum for bf16-packed operands

# Tile-size candidates (tn, ts, tk), largest / highest arithmetic-intensity
# first.  The generation-aware VMEM budget decides which one is actually used.
_CANDIDATE_TILES = (
    (1024, 2048, 1024),   # ~683 flop/byte per K-step: v6e near-roofline
    (512, 1024, 1024),    # ~341 flop/byte: above v5e/v7x break-even
    (512, 512, 512),
    (256, 512, 512),
    (128, 256, 512),
    (128, 128, 256),
)


def _round_up(x, m):
    return ((x + m - 1) // m) * m


def _vmem_capacity_bytes():
    """Physical VMEM of the current generation (fallback: 64 MiB, v7x-safe)."""
    default = 64 * 1024 * 1024
    try:
        cap = int(getattr(pltpu.get_tpu_info(), "vmem_capacity_bytes", 0))
        return cap if cap > 0 else default
    except Exception:
        return default


def _tile_and_pad(dim, target, quantum):
    """Return (tile, padded_dim).  tile is a multiple of `quantum` and at most
    max(target, quantum); prefers an exact divisor of `dim` (zero padding) and
    otherwise pads `dim` up -- never silently falls back to the full dim."""
    target = max(quantum, (target // quantum) * quantum)
    if dim <= target:
        t = _round_up(dim, quantum)
        return t, t
    t = target
    while t >= quantum:
        if dim % t == 0:
            return t, dim                     # exact divisor, no padding
        t -= quantum
    return target, _round_up(dim, target)     # pad to a multiple of the tile


def _plan_tiles(B, N, S, Kc, vmem_budget, override=None):
    """Choose (tn, ts, tk, Np, Sp, Kp, weight_resident) under the VMEM budget."""
    if override is not None:
        tn_t, ts_t, tk_t, res = override
        candidates = ((tn_t, ts_t, tk_t),)
        residency_options = (res,) if res is not None else (True, False)
    else:
        candidates = _CANDIDATE_TILES
        residency_options = (True, False)

    tn_quantum = _LANE if N % _LANE == 0 else _SUBLANE

    fitting = []
    for tn_t, ts_t, tk_t in candidates:
        tn, Np = _tile_and_pad(N, tn_t, tn_quantum)
        ts, Sp = _tile_and_pad(S, ts_t, _LANE)
        tk, Kp = _tile_and_pad(Kc, tk_t, _LANE)
        for resident in residency_options:
            kw = Kp if resident else tk
            # Every BlockSpec operand is double-buffered by the pipeliner.
            vmem = 2 * (tn * kw * 2 + tk * ts * 2 + tn * ts * 4 + tn * 4)
            if vmem <= vmem_budget:
                par = B * (Np // tn) * (Sp // ts)
                fitting.append((tn, ts, tk, Np, Sp, Kp, resident, par))

    if not fitting:                            # pathological fallback
        tn_t, ts_t, tk_t = candidates[-1]
        tn, Np = _tile_and_pad(N, tn_t, tn_quantum)
        ts, Sp = _tile_and_pad(S, ts_t, _LANE)
        tk, Kp = _tile_and_pad(Kc, tk_t, _LANE)
        return tn, ts, tk, Np, Sp, Kp, False

    best = fitting[0]
    if best[7] < 2:
        # Keep >= 2 parallel programs so both v7x TensorCores get work, but do
        # not shrink the tile area by more than 2x for it.
        for p in fitting:
            if p[7] >= 2 and 2 * p[0] * p[1] >= best[0] * best[1]:
                best = p
                break
    return best[:7]


def _make_conv_mm_kernel(weight_resident, tn, ts, tk):
    """out[b,i,j] (+)= W[i,:] @ P[b,:,j], bias-initialized at k == 0.

    The output block index is invariant along the k grid axis, so o_ref stays
    resident in VMEM across the contraction and doubles as the accumulator
    (no scratch buffer, no finalize copy/add pass)."""

    def kernel(w_ref, p_ref, b_ref, o_ref):
        k = pl.program_id(3)
        if weight_resident:
            # w_ref holds the full (tn, Kp) panel, fetched once per (b, i).
            off = pl.multiple_of(k * tk, _LANE)
            w = w_ref[:, pl.ds(off, tk)]
        else:
            w = w_ref[...]

        @pl.when(k == 0)
        def _init():
            o_ref[0] = jnp.broadcast_to(b_ref[...], (tn, ts))

        o_ref[0] += jnp.dot(w, p_ref[0], preferred_element_type=jnp.float32)

    return kernel


def window_conv_matmul(w_mat, patches_t, bias_col, *, tile_override=None):
    """(N, Kc) bf16 @ (B, Kc, S) bf16 + (N, 1) f32  ->  (B, N, S) float32."""
    N, Kc = w_mat.shape
    B, Kc2, S = patches_t.shape
    assert Kc == Kc2 and bias_col.shape == (N, 1)

    cap = _vmem_capacity_bytes()
    vmem_budget = min((cap * 3) // 4, 96 * 1024 * 1024)   # 96 MiB on v5e/v6e, 48 MiB on v7x

    tn, ts, tk, Np, Sp, Kp, resident = _plan_tiles(
        B, N, S, Kc, vmem_budget, override=tile_override)

    # Zero-pad to the tile grid (zeros are exact for the GEMM; padded output
    # rows/cols are sliced off afterwards).
    if (Np, Kp) != (N, Kc):
        w_mat = jnp.pad(w_mat, ((0, Np - N), (0, Kp - Kc)))
    if Np != N:
        bias_col = jnp.pad(bias_col, ((0, Np - N), (0, 0)))
    if (Kp, Sp) != (Kc, S):
        patches_t = jnp.pad(patches_t, ((0, 0), (0, Kp - Kc), (0, Sp - S)))

    grid = (B, Np // tn, Sp // ts, Kp // tk)
    n_i, n_j = grid[1], grid[2]

    if resident:
        # j/k-invariant index map: the weight panel is DMA'd once per (b, i).
        w_spec = pl.BlockSpec((tn, Kp), lambda b, i, j, k: (i, 0))
        w_bytes = Np * Kp * 2 * (B if n_i > 1 else 1)
    else:
        w_spec = pl.BlockSpec((tn, tk), lambda b, i, j, k: (i, k))
        w_bytes = Np * Kp * 2 * B * n_j          # re-streamed once per S-tile

    flops = 2 * B * Np * Sp * Kp
    bytes_accessed = (w_bytes
                      + B * Kp * Sp * 2 * n_i    # patches re-read once per N-tile
                      + B * Np * Sp * 4          # f32 output writeback
                      + Np * 4)                  # bias

    # TODO(synk): on v5e, if DMA is still exposed, add
    # pipeline_mode=pl.Buffered(3) on the patch BlockSpec.
    y = pl.pallas_call(
        _make_conv_mm_kernel(resident, tn, ts, tk),
        out_shape=jax.ShapeDtypeStruct((B, Np, Sp), jnp.float32),
        grid_spec=pltpu.PrefetchScalarGridSpec(
            num_scalar_prefetch=0,
            grid=grid,
            in_specs=[
                w_spec,
                pl.BlockSpec((1, tk, ts), lambda b, i, j, k: (b, k, j)),
                pl.BlockSpec((tn, 1), lambda b, i, j, k: (i, 0)),
            ],
            out_specs=pl.BlockSpec((1, tn, ts), lambda b, i, j, k: (b, i, j)),
        ),
        compiler_params=pltpu.CompilerParams(
            dimension_semantics=("parallel", "parallel", "parallel",
                                 "arbitrary"),
            vmem_limit_bytes=int(vmem_budget),
        ),
        cost_estimate=pl.CostEstimate(flops=int(flops), transcendentals=0,
                                      bytes_accessed=int(bytes_accessed)),
    )(w_mat, patches_t, bias_col)

    if (Np, Sp) != (N, S):
        y = y[:, :N, :S]
    return y


class WindowAttention:
    """JAX/Pallas port of the PyTorch WindowAttention module (forward only)."""

    def __init__(self, dim, window_size, num_heads, key):
        self.dim = dim
        self.window_size = window_size
        self.num_heads = num_heads
        ws, nh = window_size, num_heads
        ws2 = ws * ws
        assert dim % (nh * ws2) == 0, \
            "dim must be divisible by num_heads * window_size**2"
        self.K = dim // (nh * ws2)
        N, Kc = 2 * dim, dim * ws2

        kw_key, kb_key = jax.random.split(key)
        bound = 1.0 / (Kc ** 0.5)
        # nn.Conv2d(dim, 2*dim, kernel_size=ws, stride=ws) parameters.
        self.weight = jax.random.uniform(
            kw_key, (2 * dim, dim, ws, ws),
            minval=-bound, maxval=bound, dtype=jnp.float32)
        self.bias = jax.random.uniform(
            kb_key, (2 * dim,), minval=-bound, maxval=bound, dtype=jnp.float32)

        # Pre-permute the conv's output-channel axis (2*dim) = (2, nh, K, ws2)
        # into the module's final (nh, K, 2, ws2) order so the kernel writes
        # its output directly in the final memory layout.
        w_p = self.weight.reshape(2, nh, self.K, ws2, Kc)
        self.w_perm = (w_p.transpose(1, 2, 0, 3, 4)
                       .reshape(N, Kc).astype(jnp.bfloat16))
        # TODO(synk): on v7x an fp8 weight panel (per-channel scales folded
        # into the bias) would halve weight DMA and raise MXU throughput.
        b_p = self.bias.reshape(2, nh, self.K, ws2)
        self.bias_perm = b_p.transpose(1, 2, 0, 3).reshape(N, 1)

    def __call__(self, x):
        B, C, H, W = x.shape
        ws, nh = self.window_size, self.num_heads
        assert C == self.dim and H % ws == 0 and W % ws == 0
        Hp, Wp = H // ws, W // ws
        S, Kc = Hp * Wp, C * ws * ws

        # Transposed im2col: (B, Kc, S) with Kc=(c,kh,kw), S=(hp,wp).  One HBM
        # pass over x (the bf16 convert fuses into this transpose under jit).
        # TODO(synk): fuse this extraction into the kernel (6-D BlockSpec over
        # the zero-copy view + in-VMEM relayout) to delete this pre-kernel pass.
        x6 = x.reshape(B, C, Hp, ws, Wp, ws)
        patches_t = (x6.transpose(0, 1, 3, 5, 2, 4)
                     .reshape(B, Kc, S).astype(jnp.bfloat16))

        y = window_conv_matmul(self.w_perm, patches_t, self.bias_perm)

        # Output channels are pre-permuted to (nh, K, 2, ws2) and S is (hp,wp),
        # so the PyTorch view/permute/view/permute chain is exactly one reshape.
        # TODO(synk): torch's second .view acts on a non-contiguous permute and
        # would error; reshape(copy) semantics is the functional equivalent.
        return y.reshape(B * nh, self.K, 2, H, W)


# ----------------------------- self-tests ---------------------------------

def _reference(mod, x):
    ws, nh, K = mod.window_size, mod.num_heads, mod.K
    B, _, H, W = x.shape
    y = jax.lax.conv_general_dilated(
        x, mod.weight, window_strides=(ws, ws), padding="VALID",
        dimension_numbers=("NCHW", "OIHW", "NCHW"),
        precision=jax.lax.Precision.HIGHEST)
    y = y + mod.bias[None, :, None, None]
    y = y.reshape(B, 2, nh, K, H, W)
    y = y.transpose(0, 2, 1, 3, 4, 5).reshape(B * nh, 2, K, H, W)
    return y.transpose(0, 2, 1, 3, 4)


def _check_module(dim, window_size, num_heads, B, H, W, key):
    kx, kp = jax.random.split(key)
    x = jax.random.normal(kx, (B, dim, H, W), dtype=jnp.float32)
    mod = WindowAttention(dim, window_size, num_heads, kp)
    out = jax.block_until_ready(jax.jit(mod.__call__)(x))
    K = dim // (num_heads * window_size * window_size)
    assert out.shape == (B * num_heads, K, 2, H, W), out.shape
    assert out.dtype == jnp.float32
    ref = _reference(mod, x)
    err = float(jnp.max(jnp.abs(out - ref)))
    assert jnp.allclose(out, ref, atol=5e-2, rtol=5e-2), err


def _check_gemm(key, resident):
    # Deliberately unaligned shapes + tiny forced tiles: exercises padding on
    # all three dims, multi-step K accumulation into o_ref, and both the
    # resident-weight (pl.ds sliced) and streamed-weight kernel paths.
    kw, kp, kb = jax.random.split(key, 3)
    N, Kc, B, S = 48, 520, 2, 200
    w = jax.random.normal(kw, (N, Kc), dtype=jnp.float32).astype(jnp.bfloat16)
    p = jax.random.normal(kp, (B, Kc, S), dtype=jnp.float32).astype(jnp.bfloat16)
    b = jax.random.normal(kb, (N, 1), dtype=jnp.float32)
    out = jax.block_until_ready(
        window_conv_matmul(w, p, b, tile_override=(16, 128, 128, resident)))
    assert out.shape == (B, N, S) and out.dtype == jnp.float32
    ref = jnp.einsum("nk,bks->bns",
                     w.astype(jnp.float32), p.astype(jnp.float32),
                     precision=jax.lax.Precision.HIGHEST) + b[None]
    err = float(jnp.max(jnp.abs(out - ref)))
    assert jnp.allclose(out, ref, atol=5e-2, rtol=5e-2), err


if __name__ == "__main__":
    root = jax.random.PRNGKey(0)
    k1, k2, k3, k4 = jax.random.split(root, 4)

    # Module-level checks (kernel forward == PyTorch conv + layout chain),
    # including a non-trivial (dim, ws, nh) to validate the layout permutation.
    _check_module(dim=16, window_size=2, num_heads=2, B=2, H=16, W=16, key=k1)
    _check_module(dim=36, window_size=3, num_heads=2, B=2, H=12, W=12, key=k2)

    # Direct GEMM checks with forced small tiles (multi-k accumulation,
    # resident and streamed weight paths, padded dims).
    _check_gemm(k3, resident=True)
    _check_gemm(k4, resident=False)

    print("KERNEL_OK")
</pallas_src>

<mosaic_0001>
module attributes {stable_mosaic.version = 11 : i64} {
  func.func @kernel(%arg0: i32, %arg1: i32, %arg2: i32, %arg3: i32, %arg4: memref<32x128xbf16, #tpu.memory_space<vmem>>, %arg5: memref<1x128x128xbf16, #tpu.memory_space<vmem>>, %arg6: memref<32x1xf32, #tpu.memory_space<vmem>>, %arg7: memref<1x32x128xf32, #tpu.memory_space<vmem>>) attributes {dimension_semantics = [#tpu.dimension_semantics<parallel>, #tpu.dimension_semantics<parallel>, #tpu.dimension_semantics<parallel>, #tpu.dimension_semantics<arbitrary>], iteration_bounds = array<i64: 2, 1, 1, 1>, scalar_prefetch = 0 : i64, scratch_operands = 0 : i64, tpu.core_type = #tpu.core_type<tc>, window_params = [{transform_indices = @transform_0, window_bounds = array<i64: 32, 128>}, {transform_indices = @transform_1, window_bounds = array<i64: 1, 128, 128>}, {transform_indices = @transform_2, window_bounds = array<i64: 32, 1>}, {transform_indices = @transform_3, window_bounds = array<i64: 1, 32, 128>}]} {
    %c128_i32 = arith.constant 128 : i32
    %0 = arith.muli %arg3, %c128_i32 : i32
    %1 = tpu.assume_multiple %0, 128 : i32
    %c0 = arith.constant 0 : index
    %2 = arith.index_cast %1 : i32 to index
    %3 = vector.load %arg4[%c0, %2] : memref<32x128xbf16, #tpu.memory_space<vmem>>, vector<32x128xbf16>
    %c0_i32 = arith.constant 0 : i32
    %4 = arith.cmpi eq, %arg3, %c0_i32 : i32
    %5 = arith.extui %4 : i1 to i32
    %c0_i32_0 = arith.constant 0 : i32
    %6 = arith.cmpi ne, %5, %c0_i32_0 : i32
    scf.if %6 {
      %c0_10 = arith.constant 0 : index
      %c0_11 = arith.constant 0 : index
      %16 = vector.load %arg6[%c0_10, %c0_11] : memref<32x1xf32, #tpu.memory_space<vmem>>, vector<32x1xf32>
      %17 = vector.shape_cast %16 : vector<32x1xf32> to vector<32x1xf32>
      %18 = vector.broadcast %17 : vector<32x1xf32> to vector<32x128xf32>
      %c0_12 = arith.constant 0 : index
      %c0_13 = arith.constant 0 : index
      %c0_14 = arith.constant 0 : index
      %19 = vector.load %arg7[%c0_12, %c0_13, %c0_14] : memref<1x32x128xf32, #tpu.memory_space<vmem>>, vector<1x32x128xf32>
      %20 = vector.shape_cast %19 : vector<1x32x128xf32> to vector<32x128xf32>
      %21 = vector.shape_cast %18 : vector<32x128xf32> to vector<1x32x128xf32>
      tpu.vector_store %arg7[%c0_12, %c0_13, %c0_14], %21 {strides = array<i32>} : memref<1x32x128xf32, #tpu.memory_space<vmem>>, vector<1x32x128xf32>,
    } else {
    }
    %c0_1 = arith.constant 0 : index
    %c0_2 = arith.constant 0 : index
    %c0_3 = arith.constant 0 : index
    %7 = vector.load %arg7[%c0_1, %c0_2, %c0_3] : memref<1x32x128xf32, #tpu.memory_space<vmem>>, vector<1x32x128xf32>
    %8 = vector.shape_cast %7 : vector<1x32x128xf32> to vector<32x128xf32>
    %c0_4 = arith.constant 0 : index
    %c0_5 = arith.constant 0 : index
    %c0_6 = arith.constant 0 : index
    %9 = vector.load %arg5[%c0_4, %c0_5, %c0_6] : memref<1x128x128xbf16, #tpu.memory_space<vmem>>, vector<1x128x128xbf16>
    %10 = vector.shape_cast %9 : vector<1x128x128xbf16> to vector<128x128xbf16>
    %cst = arith.constant dense<0.000000e+00> : vector<32x128xf32>
    %11 = tpu.matmul %3, %10, %cst {dimension_numbers = #tpu.dot_dimension_numbers<[1], [0], [0], [1], [0, 0, 1, 1], [], []>} : vector<32x128xbf16>, vector<128x128xbf16>, vector<32x128xf32> -> vector<32x128xf32>
    %12 = arith.addf %8, %11 : vector<32x128xf32>
    %c0_7 = arith.constant 0 : index
    %c0_8 = arith.constant 0 : index
    %c0_9 = arith.constant 0 : index
    %13 = vector.load %arg7[%c0_7, %c0_8, %c0_9] : memref<1x32x128xf32, #tpu.memory_space<vmem>>, vector<1x32x128xf32>
    %14 = vector.shape_cast %13 : vector<1x32x128xf32> to vector<32x128xf32>
    %15 = vector.shape_cast %12 : vector<32x128xf32> to vector<1x32x128xf32>
    tpu.vector_store %arg7[%c0_7, %c0_8, %c0_9], %15 {strides = array<i32>} : memref<1x32x128xf32, #tpu.memory_space<vmem>>, vector<1x32x128xf32>,
    return
  }
  func.func @transform_0(%arg0: i32, %arg1: i32, %arg2: i32, %arg3: i32) -> (i32, i32) {
    %c0_i32 = arith.constant 0 : i32
    %c0_i32_0 = arith.constant 0 : i32
    return %arg1, %c0_i32 : i32, i32
  }
  func.func @transform_1(%arg0: i32, %arg1: i32, %arg2: i32, %arg3: i32) -> (i32, i32, i32) {
    %c0_i32 = arith.constant 0 : i32
    return %arg0, %arg3, %arg2 : i32, i32, i32
  }
  func.func @transform_2(%arg0: i32, %arg1: i32, %arg2: i32, %arg3: i32) -> (i32, i32) {
    %c0_i32 = arith.constant 0 : i32
    %c0_i32_0 = arith.constant 0 : i32
    return %arg1, %c0_i32 : i32, i32
  }
  func.func @transform_3(%arg0: i32, %arg1: i32, %arg2: i32, %arg3: i32) -> (i32, i32, i32) {
    %c0_i32 = arith.constant 0 : i32
    return %arg0, %arg1, %arg2 : i32, i32, i32
  }
}

</mosaic_0001>

<llo_original>
// kernel: a_call__.1
$region0: #{a_call__.1}
  #allocation0 [shape = 'u32[]', space=smem, size = 0x4, offset = 0x4, fixed_abs, tag = 'smem constant byte address 0x4 - core index']
  #allocation1 [shape = 'u32[144,128]{1,0:T(1,128)}', space=vmem, size = 0x12000, scoped, tag = 'internal scratch']
  %s0 = inlined_call_operand.vmem [shape: bf16[32,128], index: 0, kind: input, shape index: {}]
  %s1 = inlined_call_operand.vmem [shape: bf16[2,128,128], index: 1, kind: input, shape index: {}]
  %s2 = inlined_call_operand.vmem [shape: f32[32,1], index: 2, kind: input, shape index: {}]
  %s3 = inlined_call_operand.vmem [shape: f32[2,32,128], index: 3, kind: output, shape index: {}]
  %s4 = sld [smem:[#allocation0]]
  $region49: #{a_call__.1} parent=0
    _
  %s6 = ssub.s32 1, %s4
  %s7 = scalar_select 0, %s6, %s4
  loop: start=0, step=1, limit=4
  $region2: #{a_call__.1} parent=0 // loop_pre_header
    _
  $region3: #{a_call__.1} parent=0 // loop_header
    %s9 = sphi 0, %s13
    %p10 = scmp.ge.s32.totalorder %s9, 4
    %s16 = sphi 0, %s42
    %s17 = sphi 0, %s38
    %s18 = sphi 0, %s34
    %s19 = sphi 0, %s30
    %s20 = sphi 0, %s16
    %s21 = sphi 0, %s17
    %s22 = sphi 0, %s18
    %s23 = sphi 0, %s19
    %s24 = sphi 0, %s20
    %s25 = sphi 0, %s21
    %s26 = sphi 0, %s22
    %s27 = sphi 0, %s23
    %s45 = sphi 0, %s47
    %s48 = sphi 0, %s45
    %s49 = sphi 0, %s48
    %s65 = sphi 0, %s49
    %s75 = sphi 0, %s77
    %s78 = sphi 0, %s75
    %s79 = sphi 0, %s78
    %s95 = sphi 0, %s79
    %s101 = sphi 0, %s103
    %s104 = sphi 0, %s101
    %s105 = sphi 0, %s104
    %s121 = sphi 0, %s105
    %s131 = sphi 0, %s133
    %s134 = sphi 0, %s131
    %s135 = sphi 0, %s134
    %s151 = sphi 0, %s135
  $region4: #{a_call__.1} parent=0 // loop_header_branch
    %12 = sbr.rel (%p10) target = $region8
  $region5: #{a_call__.1} parent=0 // loop_body
    %s14 = ssub.s32 %s9, 1
    %s15 = ssub.s32 %s9, 2
    %s28 = sadd.s32 1, %s19
    %p29 = scmp.ge.s32.totalorder %s28, 1
    %s30 = scalar_select %p29, 0, %s28
    %s31 = sadd.s32 1, %s18
    %s32 = scalar_select %p29, %s31, %s18
    %p33 = scmp.ge.s32.totalorder %s32, 1
    %s34 = scalar_select %p33, 0, %s32
    %s35 = sadd.s32 1, %s17
    %s36 = scalar_select %p33, %s35, %s17
    %p37 = scmp.ge.s32.totalorder %s36, 1
    %s38 = scalar_select %p37, 0, %s36
    %s39 = sadd.s32 1, %s16
    %s40 = scalar_select %p37, %s39, %s16
    %p41 = scmp.ge.s32.totalorder %s40, 2
    %s42 = scalar_select %p41, 0, %s40
    %s43 = ssub.s32 %s17, %s38
    %p44 = scmp.eq.s32.totalorder %s43, 0
    %s46 = sadd.s32 %s45, 1
    %s47 = scalar_select %p44, %s45, %s46
    %p50 = pneg %p44
    %p51 = scmp.eq.s32.totalorder %s9, 1
    %p52 = por %p50, %p51
    %p53 = scmp.ne.s32.totalorder %s45, %s48
    %p54 = scmp.eq.s32.totalorder %s9, 0
    %p55 = por %p53, %p54
    %p56 = scmp.ne.s32.totalorder %s45, %s48
    %p57 = scmp.eq.s32.totalorder %s14, 1
    %p58 = por %p56, %p57
    %p59 = scmp.ne.s32.totalorder %s48, %s49
    %p60 = scmp.eq.s32.totalorder %s14, 0
    %p61 = por %p59, %p60
    %p62 = scmp.ne.s32.totalorder %s48, %s49
    %p63 = scmp.eq.s32.totalorder %s15, 1
    %p64 = por %p62, %p63
    %p66 = scmp.ne.s32.totalorder %s49, %s65
    %p67 = scmp.eq.s32.totalorder %s15, 0
    %p68 = por %p66, %p67
    %s69 = ssub.s32 %s16, %s42
    %s70 = ssub.s32 %s19, %s30
    %s71 = sor.u32 %s69, %s70
    %s72 = ssub.s32 %s18, %s34
    %s73 = sor.u32 %s71, %s72
    %p74 = scmp.eq.s32.totalorder %s73, 0
    %s76 = sadd.s32 %s75, 1
    %s77 = scalar_select %p74, %s75, %s76
    %p80 = pneg %p74
    %p81 = scmp.eq.s32.totalorder %s9, 1
    %p82 = por %p80, %p81
    %p83 = scmp.ne.s32.totalorder %s75, %s78
    %p84 = scmp.eq.s32.totalorder %s9, 0
    %p85 = por %p83, %p84
    %p86 = scmp.ne.s32.totalorder %s75, %s78
    %p87 = scmp.eq.s32.totalorder %s14, 1
    %p88 = por %p86, %p87
    %p89 = scmp.ne.s32.totalorder %s78, %s79
    %p90 = scmp.eq.s32.totalorder %s14, 0
    %p91 = por %p89, %p90
    %p92 = scmp.ne.s32.totalorder %s78, %s79
    %p93 = scmp.eq.s32.totalorder %s15, 1
    %p94 = por %p92, %p93
    %p96 = scmp.ne.s32.totalorder %s79, %s95
    %p97 = scmp.eq.s32.totalorder %s15, 0
    %p98 = por %p96, %p97
    %s99 = ssub.s32 %s17, %s38
    %p100 = scmp.eq.s32.totalorder %s99, 0
    %s102 = sadd.s32 %s101, 1
    %s103 = scalar_select %p100, %s101, %s102
    %p106 = pneg %p100
    %p107 = scmp.eq.s32.totalorder %s9, 1
    %p108 = por %p106, %p107
    %p109 = scmp.ne.s32.totalorder %s101, %s104
    %p110 = scmp.eq.s32.totalorder %s9, 0
    %p111 = por %p109, %p110
    %p112 = scmp.ne.s32.totalorder %s101, %s104
    %p113 = scmp.eq.s32.totalorder %s14, 1
    %p114 = por %p112, %p113
    %p115 = scmp.ne.s32.totalorder %s104, %s105
    %p116 = scmp.eq.s32.totalorder %s14, 0
    %p117 = por %p115, %p116
    %p118 = scmp.ne.s32.totalorder %s104, %s105
    %p119 = scmp.eq.s32.totalorder %s15, 1
    %p120 = por %p118, %p119
    %p122 = scmp.ne.s32.totalorder %s105, %s121
    %p123 = scmp.eq.s32.totalorder %s15, 0
    %p124 = por %p122, %p123
    %s125 = ssub.s32 %s16, %s42
    %s126 = ssub.s32 %s17, %s38
    %s127 = sor.u32 %s125, %s126
    %s128 = ssub.s32 %s18, %s34
    %s129 = sor.u32 %s127, %s128
    %p130 = scmp.eq.s32.totalorder %s129, 0
    %s132 = sadd.s32 %s131, 1
    %s133 = scalar_select %p130, %s131, %s132
    %p136 = pneg %p130
    %p137 = scmp.eq.s32.totalorder %s9, 1
    %p138 = por %p136, %p137
    %p139 = scmp.ne.s32.totalorder %s131, %s134
    %p140 = scmp.eq.s32.totalorder %s9, 0
    %p141 = por %p139, %p140
    %p142 = scmp.ne.s32.totalorder %s131, %s134
    %p143 = scmp.eq.s32.totalorder %s14, 1
    %p144 = por %p142, %p143
    %p145 = scmp.ne.s32.totalorder %s134, %s135
    %p146 = scmp.eq.s32.totalorder %s14, 0
    %p147 = por %p145, %p146
    %p148 = scmp.ne.s32.totalorder %s134, %s135
    %p149 = scmp.eq.s32.totalorder %s15, 1
    %p150 = por %p148, %p149
    %p152 = scmp.ne.s32.totalorder %s135, %s151
    %p153 = scmp.eq.s32.totalorder %s15, 0
    %p154 = por %p152, %p153
    %p155 = scmp.le.s32.totalorder 1, %s9
    %p156 = scmp.lt.s32.totalorder %s9, 3
    %p157 = pnand %p155, %p156
    %p158 = pneg %p157
    // Predicated region
    $region9: #{a_call__.1} parent=5 // pred_check
      _
    $region10: #{a_call__.1} parent=5 // pred_check_branch
      %160 = sbr.rel (%p157) target = $region12
    $region11: #{a_call__.1} parent=5 // pred_region
      %s161 = ssub.s32 %s9, 1
      // Predicated region
      $region13: #{a_call__.1} parent=11 // pred_check
        %p162 = pneg %p61
      $region14: #{a_call__.1} parent=11 // pred_check_branch
        %164 = sbr.rel (%p162) target = $region16
      $region15: #{a_call__.1} parent=11 // pred_region
        %s165 = smul.u32 4, %s21
        %p166 = scmp.lt.s32.totalorder %s165, 3
        %s167 = scalar_select %p166, %s165, 3
        %s168 = smul.addr %s167, 4
        %s169 = scalar_lea.vmem %s0, %s168
        %s170 = smul.u32 4, %s21
      $region16: #{a_call__.1} parent=11 // pred_fallthru
        _
      // Predicated region
      $region17: #{a_call__.1} parent=11 // pred_check
        %p171 = pneg %p117
      $region18: #{a_call__.1} parent=11 // pred_check_branch
        %173 = sbr.rel (%p171) target = $region20
      $region19: #{a_call__.1} parent=11 // pred_region
        %s174 = smul.u32 4, %s21
        %p175 = scmp.lt.s32.totalorder %s174, 3
        %s176 = scalar_select %p175, %s174, 3
        %s177 = smul.addr %s176, 8
        %s178 = scalar_lea.vmem %s2, %s177
        %s179 = smul.u32 4, %s21
      $region20: #{a_call__.1} parent=11 // pred_fallthru
        _
    $region12: #{a_call__.1} parent=5 // pred_fallthru
      _
    %p180 = scmp.lt.s32.totalorder %s9, 2
    // Predicated region
    $region21: #{a_call__.1} parent=5 // pred_check
      %p181 = pneg %p180
    $region22: #{a_call__.1} parent=5 // pred_check_branch
      %183 = sbr.rel (%p181) target = $region24
    $region23: #{a_call__.1} parent=5 // pred_region
      // Predicated region
      $region25: #{a_call__.1} parent=23 // pred_check
        %p184 = pneg %p85
      $region26: #{a_call__.1} parent=23 // pred_check_branch
        %186 = sbr.rel (%p184) target = $region28
      $region27: #{a_call__.1} parent=23 // pred_region
        %s187 = smul.u32 16, %s19
        %p188 = scmp.lt.s32.totalorder %s16, 1
        %s189 = scalar_select %p188, %s16, 1
        %p190 = scmp.lt.s32.totalorder %s187, 15
        %s191 = scalar_select %p190, %s187, 15
        %p192 = scmp.lt.s32.totalorder %s18, 0
        %s193 = scalar_select %p192, %s18, 0
        %s194 = sadd.s32 %s193, %s191
        %s195 = smul.addr %s189, 16
        %s196 = sadd.s32 %s194, %s195
        %s197 = smul.addr %s196, 4
        %s198 = scalar_lea.vmem %s1, %s197
        %s199 = smul.u32 16, %s19
      $region28: #{a_call__.1} parent=23 // pred_fallthru
        _
    $region24: #{a_call__.1} parent=5 // pred_fallthru
      _
    %p200 = scmp.le.s32.totalorder 1, %s9
    %p201 = scmp.lt.s32.totalorder %s9, 3
    %p202 = pnand %p200, %p201
    %p203 = pneg %p202
    // Predicated region
    $region29: #{a_call__.1} parent=5 // pred_check
      _
    $region30: #{a_call__.1} parent=5 // pred_check_branch
      %205 = sbr.rel (%p202) target = $region32
    $region31: #{a_call__.1} parent=5 // pred_region
      %s206 = ssub.s32 %s9, 1
      %s207 = smul.u32 4, %s21
      %p208 = scmp.lt.s32.totalorder %s207, 3
      %s209 = scalar_select %p208, %s207, 3
      %s210 = smul.addr %s209, 4
      %s211 = scalar_lea.vmem %s0, %s210
      %p212 = pneg %p61
      %p213 = pneg %p58
      %s214 = smul.u32 16, %s23
      %p215 = scmp.lt.s32.totalorder %s20, 1
      %s216 = scalar_select %p215, %s20, 1
      %p217 = scmp.lt.s32.totalorder %s214, 15
      %s218 = scalar_select %p217, %s214, 15
      %p219 = scmp.lt.s32.totalorder %s22, 0
      %s220 = scalar_select %p219, %s22, 0
      %s221 = sadd.s32 %s220, %s218
      %s222 = smul.addr %s216, 16
      %s223 = sadd.s32 %s221, %s222
      %s224 = smul.addr %s223, 4
      %s225 = scalar_lea.vmem %s1, %s224
      %p226 = pneg %p91
      %p227 = pneg %p88
      %s228 = smul.u32 4, %s21
      %p229 = scmp.lt.s32.totalorder %s228, 3
      %s230 = scalar_select %p229, %s228, 3
      %s231 = smul.addr %s230, 8
      %s232 = scalar_lea.vmem %s2, %s231
      %p233 = pneg %p117
      %p234 = pneg %p114
      %p235 = pneg %p147
      %p236 = pneg %p144
      %s237 = smul.u32 4, %s21
      %p238 = scmp.lt.s32.totalorder %s20, 1
      %s239 = scalar_select %p238, %s20, 1
      %p240 = scmp.lt.s32.totalorder %s237, 3
      %s241 = scalar_select %p240, %s237, 3
      %p242 = scmp.lt.s32.totalorder %s22, 0
      %s243 = scalar_select %p242, %s22, 0
      %s244 = sadd.s32 %s243, %s241
      %s245 = smul.addr %s239, 4
      %s246 = sadd.s32 %s244, %s245
      %s247 = smul.addr %s246, 8
      %s248 = scalar_lea.vmem %s3, %s247
      %s249 = smul.u32 4, %s21
      %p250 = scmp.lt.s32.totalorder %s249, 3
      %s251 = scalar_select %p250, %s249, 3
      %s252 = smul.addr %s251, 4
      %s253 = scalar_lea.vmem %s0, %s252
      %s254 = smul.u32 4, %s21
      %s255 = smul.u32 16, %s23
      %p256 = scmp.lt.s32.totalorder %s20, 1
      %s257 = scalar_select %p256, %s20, 1
      %p258 = scmp.lt.s32.totalorder %s255, 15
      %s259 = scalar_select %p258, %s255, 15
      %p260 = scmp.lt.s32.totalorder %s22, 0
      %s261 = scalar_select %p260, %s22, 0
      %s262 = sadd.s32 %s261, %s259
      %s263 = smul.addr %s257, 16
      %s264 = sadd.s32 %s262, %s263
      %s265 = smul.addr %s264, 4
      %s266 = scalar_lea.vmem %s1, %s265
      %s267 = smul.u32 16, %s23
      %s268 = smul.u32 4, %s21
      %p269 = scmp.lt.s32.totalorder %s268, 3
      %s270 = scalar_select %p269, %s268, 3
      %s271 = smul.addr %s270, 8
      %s272 = scalar_lea.vmem %s2, %s271
      %s273 = smul.u32 4, %s21
      %s274 = smul.u32 4, %s21
      %p275 = scmp.lt.s32.totalorder %s20, 1
      %s276 = scalar_select %p275, %s20, 1
      %p277 = scmp.lt.s32.totalorder %s274, 3
      %s278 = scalar_select %p277, %s274, 3
      %p279 = scmp.lt.s32.totalorder %s22, 0
      %s280 = scalar_select %p279, %s22, 0
      %s281 = sadd.s32 %s280, %s278
      %s282 = smul.addr %s276, 4
      %s283 = sadd.s32 %s281, %s282
      %s284 = smul.addr %s283, 8
      %s285 = scalar_lea.vmem %s3, %s284
      %s286 = smul.u32 4, %s21
      %s288 = smul.u32 %s23, 128
      %s289 = sshra.s32 %s288, 7
      %s290 = sand.u32 %s288, 127
      %s291 = smul.addr %s289, 4
      %s292 = scalar_lea.vmem %s253, %s291
      %v293 = vld [vmem:[%s292] sm:$0xf]
      %v294 = vld [vmem:[%s292 + $0x4] sm:$0xf]
      %v295 = vld [vmem:[%s292 + $0x8] sm:$0xf]
      %v296 = vld [vmem:[%s292 + $0xc] sm:$0xf]
      %p297 = scmp.eq.s32.totalorder %s23, 0
      // Predicated region
      $region33: #{a_call__.1} parent=31 // pred_check
        %p298 = pneg %p297
      $region34: #{a_call__.1} parent=31 // pred_check_branch
        %300 = sbr.rel (%p298) target = $region36
      $region35: #{a_call__.1} parent=31 // pred_region
        %v301 = vld [vmem:[%s272] sm:$0xff]
        %v302 = vld [vmem:[%s272 + $0x8] sm:$0xff]
        %v303 = vld [vmem:[%s272 + $0x10] sm:$0xff]
        %v304 = vld [vmem:[%s272 + $0x18] sm:$0xff]
        %306 = vset.pattern.permute.xlu0 0
        %307 = vperm.xlu0 %306, %v301
        %v308 = vpop.permute.xlu0 %307
        %311 = vset.pattern.permute.xlu0 0
        %312 = vperm.xlu0 %311, %v302
        %v313 = vpop.permute.xlu0 %312
        %316 = vset.pattern.permute.xlu0 0
        %317 = vperm.xlu0 %316, %v303
        %v318 = vpop.permute.xlu0 %317
        %321 = vset.pattern.permute.xlu0 0
        %322 = vperm.xlu0 %321, %v304
        %v323 = vpop.permute.xlu0 %322
        %325 = vst [vmem:[%s285] sm:$0xff] %v308
        %326 = vst [vmem:[%s285 + $0x8] sm:$0xff] %v313
        %327 = vst [vmem:[%s285 + $0x10] sm:$0xff] %v318
        %328 = vst [vmem:[%s285 + $0x18] sm:$0xff] %v323
      $region36: #{a_call__.1} parent=31 // pred_fallthru
        _
      %v329 = vld [vmem:[%s285] sm:$0xff]
      %v330 = vld [vmem:[%s285 + $0x8] sm:$0xff]
      %v331 = vld [vmem:[%s285 + $0x10] sm:$0xff]
      %v332 = vld [vmem:[%s285 + $0x18] sm:$0xff]
      %v333 = vld [vmem:[%s266] sm:$0xf]
      %v334 = vld [vmem:[%s266 + $0x4] sm:$0xf]
      %v335 = vld [vmem:[%s266 + $0x8] sm:$0xf]
      %v336 = vld [vmem:[%s266 + $0xc] sm:$0xf]
      %v337 = vld [vmem:[%s266 + $0x10] sm:$0xf]
      %v338 = vld [vmem:[%s266 + $0x14] sm:$0xf]
      %v339 = vld [vmem:[%s266 + $0x18] sm:$0xf]
      %v340 = vld [vmem:[%s266 + $0x1c] sm:$0xf]
      %v341 = vld [vmem:[%s266 + $0x20] sm:$0xf]
      %v342 = vld [vmem:[%s266 + $0x24] sm:$0xf]
      %v343 = vld [vmem:[%s266 + $0x28] sm:$0xf]
      %v344 = vld [vmem:[%s266 + $0x2c] sm:$0xf]
      %v345 = vld [vmem:[%s266 + $0x30] sm:$0xf]
      %v346 = vld [vmem:[%s266 + $0x34] sm:$0xf]
      %v347 = vld [vmem:[%s266 + $0x38] sm:$0xf]
      %v348 = vld [vmem:[%s266 + $0x3c] sm:$0xf]
      %v353 = vunpack.c.l.b16 %v293
      %v354 = vunpack.c.l.b16 %v294
      %v355 = vunpack.c.l.b16 %v295
      %v356 = vunpack.c.l.b16 %v296
      %v357 = vpack.c.b16 %v354, %v353
      %v358 = vpack.c.b16 %v356, %v355
      %v377 = vunpack.c.l.b16 %v333
      %v378 = vunpack.c.l.b16 %v334
      %v379 = vunpack.c.l.b16 %v335
      %v380 = vunpack.c.l.b16 %v336
      %v381 = vunpack.c.l.b16 %v337
      %v382 = vunpack.c.l.b16 %v338
      %v383 = vunpack.c.l.b16 %v339
      %v384 = vunpack.c.l.b16 %v340
      %v385 = vunpack.c.l.b16 %v341
      %v386 = vunpack.c.l.b16 %v342
      %v387 = vunpack.c.l.b16 %v343
      %v388 = vunpack.c.l.b16 %v344
      %v389 = vunpack.c.l.b16 %v345
      %v390 = vunpack.c.l.b16 %v346
      %v391 = vunpack.c.l.b16 %v347
      %v392 = vunpack.c.l.b16 %v348
      %v393 = vpack.c.b16 %v378, %v377
      %v394 = vpack.c.b16 %v380, %v379
      %v395 = vpack.c.b16 %v382, %v381
      %v396 = vpack.c.b16 %v384, %v383
      %v397 = vpack.c.b16 %v386, %v385
      %v398 = vpack.c.b16 %v388, %v387
      %v399 = vpack.c.b16 %v390, %v389
      %v400 = vpack.c.b16 %v392, %v391
      %409 = vmatprep.subr.bf16.mxu0 0
      %410 = vmatpush1.bf16.msra.mxu0 %v393
      %411 = vmatprep.subr.bf16.mxu0 0
      %412 = vmatpush1.bf16.msra.mxu0 %v394
      %413 = vmatprep.subr.bf16.mxu0 0
      %414 = vmatpush1.bf16.msra.mxu0 %v395
      %415 = vmatprep.subr.bf16.mxu0 0
      %416 = vmatpush1.bf16.msra.mxu0 %v396
      %417 = vmatprep.subr.bf16.mxu0 0
      %418 = vmatpush1.bf16.msra.mxu0 %v397
      %419 = vmatprep.subr.bf16.mxu0 0
      %420 = vmatpush1.bf16.msra.mxu0 %v398
      %421 = vmatprep.subr.bf16.mxu0 0
      %422 = vmatpush1.bf16.msra.mxu0 %v399
      %423 = vmatprep.subr.bf16.mxu0 0
      %424 = vmatpush1.bf16.msra.mxu0 %v400
      %425 = vmatprep.subr.bf16.mxu0 0
      %426 = vmatpush1.bf16.msra.mxu0 0
      %427 = vmatprep.subr.bf16.mxu0 0
      %428 = vmatpush1.bf16.msra.mxu0 0
      %429 = vmatprep.subr.bf16.mxu0 0
      %430 = vmatpush1.bf16.msra.mxu0 0
      %431 = vmatprep.subr.bf16.mxu0 0
      %432 = vmatpush1.bf16.msra.mxu0 0
      %433 = vmatprep.subr.bf16.mxu0 0
      %434 = vmatpush1.bf16.msra.mxu0 0
      %435 = vmatprep.subr.bf16.mxu0 0
      %436 = vmatpush1.bf16.msra.mxu0 0
      %437 = vmatprep.subr.bf16.mxu0 0
      %438 = vmatpush1.bf16.msra.mxu0 0
      %439 = vmatprep.subr.bf16.mxu0 0
      %440 = vmatpush1.bf16.msra.mxu0 0
      %441 = vmatprep.mubr.bf16.mxu0 0
      %442 = vmatmul.mubr.bf16.gmra.mrb[0].mxu0 %v357
      %v443 = vpop.f32.mrb[0].mxu0
      %v444 = vadd.f32 0.0, %v443
      %v445 = vpop.f32.mrb[0].mxu0
      %v446 = vpop.f32.mrb[0].mxu0
      %v447 = vadd.f32 0.0, %v446
      %v448 = vpop.f32.mrb[0].mxu0
      %449 = vmatprep.mubr.bf16.mxu0 0
      %450 = vmatmul.mubr.bf16.gmra.mrb[0].mxu0 %v358
      %v451 = vpop.f32.mrb[0].mxu0
      %v452 = vadd.f32 0.0, %v451
      %v453 = vpop.f32.mrb[0].mxu0
      %v454 = vpop.f32.mrb[0].mxu0
      %v455 = vadd.f32 0.0, %v454
      %v456 = vpop.f32.mrb[0].mxu0
      %457 = vdwg.mxu0
      %v458 = vadd.f32 %v329, %v444
      %v459 = vadd.f32 %v330, %v447
      %v460 = vadd.f32 %v331, %v452
      %v461 = vadd.f32 %v332, %v455
      %462 = vst [vmem:[%s285] sm:$0xff] %v458
      %463 = vst [vmem:[%s285 + $0x8] sm:$0xff] %v459
      %464 = vst [vmem:[%s285 + $0x10] sm:$0xff] %v460
      %465 = vst [vmem:[%s285 + $0x18] sm:$0xff] %v461
      %s466 = smul.u32 4, %s21
      %p467 = scmp.lt.s32.totalorder %s20, 1
      %s468 = scalar_select %p467, %s20, 1
      %p469 = scmp.lt.s32.totalorder %s466, 3
      %s470 = scalar_select %p469, %s466, 3
      %p471 = scmp.lt.s32.totalorder %s22, 0
      %s472 = scalar_select %p471, %s22, 0
      %s473 = sadd.s32 %s472, %s470
      %s474 = smul.addr %s468, 4
      %s475 = sadd.s32 %s473, %s474
      %s476 = smul.addr %s475, 8
      %s477 = scalar_lea.vmem %s3, %s476
      // Predicated region
      $region37: #{a_call__.1} parent=31 // pred_check
        %p478 = pneg %p144
      $region38: #{a_call__.1} parent=31 // pred_check_branch
        %480 = sbr.rel (%p478) target = $region40
      $region39: #{a_call__.1} parent=31 // pred_region
        %s481 = smul.u32 4, %s21
      $region40: #{a_call__.1} parent=31 // pred_fallthru
        _
    $region32: #{a_call__.1} parent=5 // pred_fallthru
      _
    %p482 = scmp.le.s32.totalorder 2, %s9
    // Predicated region
    $region41: #{a_call__.1} parent=5 // pred_check
      %p483 = pneg %p482
    $region42: #{a_call__.1} parent=5 // pred_check_branch
      %485 = sbr.rel (%p483) target = $region44
    $region43: #{a_call__.1} parent=5 // pred_region
      %s486 = ssub.s32 %s9, 2
      // Predicated region
      $region45: #{a_call__.1} parent=43 // pred_check
        %p487 = pneg %p150
      $region46: #{a_call__.1} parent=43 // pred_check_branch
        %489 = sbr.rel (%p487) target = $region48
      $region47: #{a_call__.1} parent=43 // pred_region
        %s490 = smul.u32 4, %s25
        %p491 = scmp.lt.s32.totalorder %s24, 1
        %s492 = scalar_select %p491, %s24, 1
        %p493 = scmp.lt.s32.totalorder %s490, 3
        %s494 = scalar_select %p493, %s490, 3
        %p495 = scmp.lt.s32.totalorder %s26, 0
        %s496 = scalar_select %p495, %s26, 0
        %s497 = sadd.s32 %s496, %s494
        %s498 = smul.addr %s492, 4
        %s499 = sadd.s32 %s497, %s498
        %s500 = smul.addr %s499, 8
        %s501 = scalar_lea.vmem %s3, %s500
      $region48: #{a_call__.1} parent=43 // pred_fallthru
        _
    $region44: #{a_call__.1} parent=5 // pred_fallthru
      _
  $region6: #{a_call__.1} parent=0 // loop_footer
    %s13 = sadd.s32 1, %s9
  $region7: #{a_call__.1} parent=0 // loop_footer_branch
    %8 = sbr.rel target = $region3
  $region8: #{a_call__.1} parent=0 // loop_exit
    _

</llo_original>
